<compile_context>
chip_gen: v7x
topology: tpu7x:2x2x1
jax: 0.10.0
libtpu: 0.0.40
codegen_flags: <defaults>
</compile_context>

<pallas_src>
import functools
import math

import jax
import jax.numpy as jnp
from jax.experimental import pallas as pl
from jax.experimental.pallas import tpu as pltpu


def _residual_pointwise_conv_kernel(x_ref, w_ref, b_ref, o_ref, *, module_factor):
    # x_ref: (C, T_tile)   activation tile, T on the lane axis
    # w_ref: (C, C)        pointwise-conv weight (out_ch, in_ch), resident
    # b_ref: (C, 1)        bias, resident
    # o_ref: (C, T_tile)
    x = x_ref[...]
    acc = jnp.dot(w_ref[...], x, preferred_element_type=jnp.float32)   # (C, T_tile)
    acc = acc + b_ref[...].astype(jnp.float32)                          # broadcast over T
    out = acc * module_factor + x.astype(jnp.float32)                   # fused residual
    o_ref[...] = out.astype(o_ref.dtype)


def residual_pointwise_conv1d(x, weight, bias, module_factor=1.0, t_tile=512):
    """out = Conv1d_1x1(x) * module_factor + x, in native (B, C, T) layout.

    Args:
      x:      (B, C, T)
      weight: (C, C)   torch Conv1d weight squeezed over the kernel dim
      bias:   (C,)
    """
    B, C, T = x.shape
    assert weight.shape == (C, C), "residual add requires C_in == C_out"
    assert t_tile % 128 == 0

    # Lane tile: a multiple of 128 (lane-dense, unmasked vst); pad T so the
    # grid divides evenly.  Per-step VMEM ~= 2 double-buffers * 2 * C*tile*4B
    # plus the resident weight/bias -> well under the 16/32 MiB scoped limits
    # (v5e / v6e / v7x) for t_tile<=1024 at moderate C.
    # TODO(synk): for very large C (>~1024) add a K grid axis ("arbitrary")
    # with a VMEM f32 accumulator instead of loading all of C in one block.
    tile = min(t_tile, max(128, 128 * pl.cdiv(T, 128)))
    T_pad = tile * pl.cdiv(T, tile)
    x_p = x if T_pad == T else jnp.pad(x, ((0, 0), (0, 0), (0, T_pad - T)))

    b2d = bias.reshape(C, 1)
    grid = (B, T_pad // tile)

    flops = 2 * B * T_pad * C * C + 3 * B * T_pad * C
    bytes_accessed = (
        (x_p.size + B * C * T_pad) * x.dtype.itemsize
        + weight.size * weight.dtype.itemsize
        + bias.size * bias.dtype.itemsize
    )

    out = pl.pallas_call(
        functools.partial(
            _residual_pointwise_conv_kernel, module_factor=float(module_factor)
        ),
        out_shape=jax.ShapeDtypeStruct((B, C, T_pad), x.dtype),
        grid=grid,
        in_specs=[
            # activation: batch dim squeezed, full channel dim, T tiled (lanes)
            pl.BlockSpec((None, C, tile), lambda b, t: (b, 0, t)),
            # weight / bias stay resident across the whole grid
            pl.BlockSpec((C, C), lambda b, t: (0, 0)),
            pl.BlockSpec((C, 1), lambda b, t: (0, 0)),
        ],
        out_specs=pl.BlockSpec((None, C, tile), lambda b, t: (b, 0, t)),
        compiler_params=pltpu.CompilerParams(
            dimension_semantics=("parallel", "parallel")
        ),
        cost_estimate=pl.CostEstimate(
            flops=flops, transcendentals=0, bytes_accessed=bytes_accessed
        ),
    )(x_p, weight, b2d)

    return out if T_pad == T else out[:, :, :T]


if __name__ == "__main__":
    key = jax.random.PRNGKey(0)
    k_x, k_w, k_b, k_x2 = jax.random.split(key, 4)

    batch, channels, time = 2, 8, 512
    module_factor = 0.5

    # Deterministic, torch-Conv1d-like init (kaiming-uniform scale over fan_in).
    fan_in = channels * 1  # kernel_size == 1
    bound = 1.0 / math.sqrt(fan_in)
    x = jax.random.normal(k_x, (batch, channels, time), dtype=jnp.float32)
    weight = jax.random.uniform(
        k_w, (channels, channels), minval=-bound, maxval=bound, dtype=jnp.float32
    )
    bias = jax.random.uniform(
        k_b, (channels,), minval=-bound, maxval=bound, dtype=jnp.float32
    )

    def ref_fn(inp):
        y = jnp.einsum("oc,bct->bot", weight, inp) + bias[None, :, None]
        return y * module_factor + inp  # ResidualConnectionModule.forward

    # Case 1: multi-tile grid (T=512, tile=256 -> grid (2, 2), no padding).
    out = jax.block_until_ready(
        residual_pointwise_conv1d(x, weight, bias, module_factor, t_tile=256)
    )
    assert out.shape == x.shape
    assert jnp.allclose(out, ref_fn(x), atol=1e-4, rtol=1e-4)

    # Case 2: T not a multiple of 128 (exercises the lane-padding path).
    x2 = jax.random.normal(k_x2, (batch, channels, 200), dtype=jnp.float32)
    out2 = jax.block_until_ready(
        residual_pointwise_conv1d(x2, weight, bias, module_factor)
    )
    assert out2.shape == x2.shape
    assert jnp.allclose(out2, ref_fn(x2), atol=1e-4, rtol=1e-4)

    print("KERNEL_OK")
</pallas_src>

<mosaic_0001>
module attributes {stable_mosaic.version = 11 : i64} {
  func.func @_residual_pointwise_conv_kernel(%arg0: i32, %arg1: i32, %arg2: memref<1x8x256xf32, #tpu.memory_space<vmem>>, %arg3: memref<8x8xf32, #tpu.memory_space<vmem>>, %arg4: memref<8x1xf32, #tpu.memory_space<vmem>>, %arg5: memref<1x8x256xf32, #tpu.memory_space<vmem>>) attributes {dimension_semantics = [#tpu.dimension_semantics<parallel>, #tpu.dimension_semantics<parallel>], iteration_bounds = array<i64: 2, 2>, scalar_prefetch = 0 : i64, scratch_operands = 0 : i64, tpu.core_type = #tpu.core_type<tc>, window_params = [{transform_indices = @transform_0, window_bounds = array<i64: 1, 8, 256>}, {pipeline_mode = #tpu.pipeline_mode<synchronous>, transform_indices = @transform_1, window_bounds = array<i64: 8, 8>}, {pipeline_mode = #tpu.pipeline_mode<synchronous>, transform_indices = @transform_2, window_bounds = array<i64: 8, 1>}, {transform_indices = @transform_3, window_bounds = array<i64: 1, 8, 256>}]} {
    %c0 = arith.constant 0 : index
    %c0_0 = arith.constant 0 : index
    %c0_1 = arith.constant 0 : index
    %0 = vector.load %arg2[%c0, %c0_0, %c0_1] : memref<1x8x256xf32, #tpu.memory_space<vmem>>, vector<1x8x256xf32>
    %1 = vector.shape_cast %0 : vector<1x8x256xf32> to vector<8x256xf32>
    %c0_2 = arith.constant 0 : index
    %c0_3 = arith.constant 0 : index
    %2 = vector.load %arg3[%c0_2, %c0_3] : memref<8x8xf32, #tpu.memory_space<vmem>>, vector<8x8xf32>
    %cst = arith.constant dense<0.000000e+00> : vector<8x256xf32>
    %3 = tpu.matmul %2, %1, %cst {dimension_numbers = #tpu.dot_dimension_numbers<[1], [0], [0], [1], [0, 0, 1, 1], [], []>} : vector<8x8xf32>, vector<8x256xf32>, vector<8x256xf32> -> vector<8x256xf32>
    %c0_4 = arith.constant 0 : index
    %c0_5 = arith.constant 0 : index
    %4 = vector.load %arg4[%c0_4, %c0_5] : memref<8x1xf32, #tpu.memory_space<vmem>>, vector<8x1xf32>
    %5 = vector.broadcast %4 : vector<8x1xf32> to vector<8x256xf32>
    %6 = arith.addf %3, %5 : vector<8x256xf32>
    %cst_6 = arith.constant 5.000000e-01 : f32
    %7 = vector.broadcast %cst_6 : f32 to vector<8x256xf32>
    %8 = arith.mulf %6, %7 : vector<8x256xf32>
    %9 = arith.addf %8, %1 : vector<8x256xf32>
    %c0_7 = arith.constant 0 : index
    %c0_8 = arith.constant 0 : index
    %c0_9 = arith.constant 0 : index
    %10 = vector.load %arg5[%c0_7, %c0_8, %c0_9] : memref<1x8x256xf32, #tpu.memory_space<vmem>>, vector<1x8x256xf32>
    %11 = vector.shape_cast %10 : vector<1x8x256xf32> to vector<8x256xf32>
    %12 = vector.shape_cast %9 : vector<8x256xf32> to vector<1x8x256xf32>
    tpu.vector_store %arg5[%c0_7, %c0_8, %c0_9], %12 {strides = array<i32>} : memref<1x8x256xf32, #tpu.memory_space<vmem>>, vector<1x8x256xf32>,
    return
  }
  func.func @transform_0(%arg0: i32, %arg1: i32) -> (i32, i32, i32) {
    %c0_i32 = arith.constant 0 : i32
    %c0_i32_0 = arith.constant 0 : i32
    return %arg0, %c0_i32, %arg1 : i32, i32, i32
  }
  func.func @transform_1(%arg0: i32, %arg1: i32) -> (i32, i32) {
    %c0_i32 = arith.constant 0 : i32
    %c0_i32_0 = arith.constant 0 : i32
    %c0_i32_1 = arith.constant 0 : i32
    return %c0_i32, %c0_i32_0 : i32, i32
  }
  func.func @transform_2(%arg0: i32, %arg1: i32) -> (i32, i32) {
    %c0_i32 = arith.constant 0 : i32
    %c0_i32_0 = arith.constant 0 : i32
    %c0_i32_1 = arith.constant 0 : i32
    return %c0_i32, %c0_i32_0 : i32, i32
  }
  func.func @transform_3(%arg0: i32, %arg1: i32) -> (i32, i32, i32) {
    %c0_i32 = arith.constant 0 : i32
    %c0_i32_0 = arith.constant 0 : i32
    return %arg0, %c0_i32, %arg1 : i32, i32, i32
  }
}

</mosaic_0001>

<llo_original>
// kernel: tpu_custom_call.1
$region0: #{tpu_custom_call.1}
  #allocation0 [shape = 'u32[]', space=smem, size = 0x4, offset = 0x4, fixed_abs, tag = 'smem constant byte address 0x4 - core index']
  #allocation1 [shape = 'u32[144,128]{1,0:T(1,128)}', space=vmem, size = 0x12000, scoped, tag = 'internal scratch']
  %s0 = inlined_call_operand.hbm [shape: f32[2,8,512], index: 0, kind: input, shape index: {}]
  %s1 = inlined_call_operand.vmem [shape: f32[8,8], index: 1, kind: input, shape index: {}]
  %s2 = inlined_call_operand.vmem [shape: f32[8,1], index: 2, kind: input, shape index: {}]
  %s3 = inlined_call_operand.hbm [shape: f32[2,8,512], index: 3, kind: output, shape index: {}]
  %s4 = sld [smem:[#allocation0]]
  $region49: #{tpu_custom_call.1} parent=0
    _
  %s6 = ssub.s32 1, %s4
  %s7 = scalar_select 0, %s6, %s4
  $region1: #{tpu_custom_call.1} parent=0
    #allocation2 [shape = 'u8[16384]{0}', space=vmem, size = 0x4000, scoped, tag = 'input window, operand 0']
    #allocation3 [shape = 's32[2]{0}', space=sflag, size = 0x8, scoped, tag = 'scoped memory for tpu_custom_call.1']
    #allocation4 [shape = 's32[2]{0}', space=sflag, size = 0x8, scoped, tag = 'scoped memory for tpu_custom_call.1']
    #allocation5 [shape = 'u8[16384]{0}', space=vmem, size = 0x4000, scoped, tag = 'output window, operand 0']
    %8 = vsyncpa [#allocation3], 0
    %s9 = scalar_lea.sflag [#allocation3], 1
    %10 = vsyncpa %s9, 0
    %11 = vsyncpa [#allocation4], 0
    %s12 = scalar_lea.sflag [#allocation4], 1
    %13 = vsyncpa %s12, 0
    loop: start=0, step=1, limit=6
    $region2: #{tpu_custom_call.1} parent=1 // loop_pre_header
      _
    $region3: #{tpu_custom_call.1} parent=1 // loop_header
      %s15 = sphi 0, %s19
      %p16 = scmp.ge.s32.totalorder %s15, 6
      %s22 = sphi 0, %s34
      %s23 = sphi 0, %s30
      %s24 = sphi 0, %s22
      %s25 = sphi 0, %s23
      %s26 = sphi 0, %s24
      %s27 = sphi 0, %s25
      %s39 = sphi 0, %s41
      %s42 = sphi 0, %s39
      %s43 = sphi 0, %s42
      %s59 = sphi 0, %s43
      %s63 = sphi 0, %s63
      %s65 = sphi 0, %s63
      %s66 = sphi 0, %s65
      %s80 = sphi 0, %s66
      %s84 = sphi 0, %s84
      %s86 = sphi 0, %s84
      %s87 = sphi 0, %s86
      %s101 = sphi 0, %s87
      %s109 = sphi 0, %s111
      %s112 = sphi 0, %s109
      %s113 = sphi 0, %s112
      %s129 = sphi 0, %s113
    $region4: #{tpu_custom_call.1} parent=1 // loop_header_branch
      %18 = sbr.rel (%p16) target = $region8
    $region5: #{tpu_custom_call.1} parent=1 // loop_body
      %s20 = ssub.s32 %s15, 1
      %s21 = ssub.s32 %s15, 2
      %s28 = sadd.s32 1, %s23
      %p29 = scmp.ge.s32.totalorder %s28, 2
      %s30 = scalar_select %p29, 0, %s28
      %s31 = sadd.s32 1, %s22
      %s32 = scalar_select %p29, %s31, %s22
      %p33 = scmp.ge.s32.totalorder %s32, 2
      %s34 = scalar_select %p33, 0, %s32
      %s35 = ssub.s32 %s22, %s34
      %s36 = ssub.s32 %s23, %s30
      %s37 = sor.u32 %s35, %s36
      %p38 = scmp.eq.s32.totalorder %s37, 0
      %s40 = sadd.s32 %s39, 1
      %s41 = scalar_select %p38, %s39, %s40
      %p44 = pneg %p38
      %p45 = scmp.eq.s32.totalorder %s15, 3
      %p46 = por %p44, %p45
      %p47 = scmp.ne.s32.totalorder %s39, %s42
      %p48 = scmp.eq.s32.totalorder %s15, 0
      %p49 = por %p47, %p48
      %p50 = scmp.ne.s32.totalorder %s39, %s42
      %p51 = scmp.eq.s32.totalorder %s20, 3
      %p52 = por %p50, %p51
      %p53 = scmp.ne.s32.totalorder %s42, %s43
      %p54 = scmp.eq.s32.totalorder %s20, 0
      %p55 = por %p53, %p54
      %p56 = scmp.ne.s32.totalorder %s42, %s43
      %p57 = scmp.eq.s32.totalorder %s21, 3
      %p58 = por %p56, %p57
      %p60 = scmp.ne.s32.totalorder %s43, %s59
      %p61 = scmp.eq.s32.totalorder %s21, 0
      %p62 = por %p60, %p61
      %s64 = sadd.s32 %s63, 1
      %p67 = scmp.eq.s32.totalorder %s15, 3
      %p68 = scmp.ne.s32.totalorder %s63, %s65
      %p69 = scmp.eq.s32.totalorder %s15, 0
      %p70 = por %p68, %p69
      %p71 = scmp.ne.s32.totalorder %s63, %s65
      %p72 = scmp.eq.s32.totalorder %s20, 3
      %p73 = por %p71, %p72
      %p74 = scmp.ne.s32.totalorder %s65, %s66
      %p75 = scmp.eq.s32.totalorder %s20, 0
      %p76 = por %p74, %p75
      %p77 = scmp.ne.s32.totalorder %s65, %s66
      %p78 = scmp.eq.s32.totalorder %s21, 3
      %p79 = por %p77, %p78
      %p81 = scmp.ne.s32.totalorder %s66, %s80
      %p82 = scmp.eq.s32.totalorder %s21, 0
      %p83 = por %p81, %p82
      %s85 = sadd.s32 %s84, 1
      %p88 = scmp.eq.s32.totalorder %s15, 3
      %p89 = scmp.ne.s32.totalorder %s84, %s86
      %p90 = scmp.eq.s32.totalorder %s15, 0
      %p91 = por %p89, %p90
      %p92 = scmp.ne.s32.totalorder %s84, %s86
      %p93 = scmp.eq.s32.totalorder %s20, 3
      %p94 = por %p92, %p93
      %p95 = scmp.ne.s32.totalorder %s86, %s87
      %p96 = scmp.eq.s32.totalorder %s20, 0
      %p97 = por %p95, %p96
      %p98 = scmp.ne.s32.totalorder %s86, %s87
      %p99 = scmp.eq.s32.totalorder %s21, 3
      %p100 = por %p98, %p99
      %p102 = scmp.ne.s32.totalorder %s87, %s101
      %p103 = scmp.eq.s32.totalorder %s21, 0
      %p104 = por %p102, %p103
      %s105 = ssub.s32 %s22, %s34
      %s106 = ssub.s32 %s23, %s30
      %s107 = sor.u32 %s105, %s106
      %p108 = scmp.eq.s32.totalorder %s107, 0
      %s110 = sadd.s32 %s109, 1
      %s111 = scalar_select %p108, %s109, %s110
      %p114 = pneg %p108
      %p115 = scmp.eq.s32.totalorder %s15, 3
      %p116 = por %p114, %p115
      %p117 = scmp.ne.s32.totalorder %s109, %s112
      %p118 = scmp.eq.s32.totalorder %s15, 0
      %p119 = por %p117, %p118
      %p120 = scmp.ne.s32.totalorder %s109, %s112
      %p121 = scmp.eq.s32.totalorder %s20, 3
      %p122 = por %p120, %p121
      %p123 = scmp.ne.s32.totalorder %s112, %s113
      %p124 = scmp.eq.s32.totalorder %s20, 0
      %p125 = por %p123, %p124
      %p126 = scmp.ne.s32.totalorder %s112, %s113
      %p127 = scmp.eq.s32.totalorder %s21, 3
      %p128 = por %p126, %p127
      %p130 = scmp.ne.s32.totalorder %s113, %s129
      %p131 = scmp.eq.s32.totalorder %s21, 0
      %p132 = por %p130, %p131
      %p133 = scmp.le.s32.totalorder 1, %s15
      %p134 = scmp.lt.s32.totalorder %s15, 5
      %p135 = pnand %p133, %p134
      %p136 = pneg %p135
      // Predicated region
      $region9: #{tpu_custom_call.1} parent=5 // pred_check
        _
      $region10: #{tpu_custom_call.1} parent=5 // pred_check_branch
        %138 = sbr.rel (%p135) target = $region12
      $region11: #{tpu_custom_call.1} parent=5 // pred_region
        %s139 = ssub.s32 %s15, 1
        // Predicated region
        $region13: #{tpu_custom_call.1} parent=11 // pred_check
          %p140 = pneg %p76
        $region14: #{tpu_custom_call.1} parent=11 // pred_check_branch
          %142 = sbr.rel (%p140) target = $region16
        $region15: #{tpu_custom_call.1} parent=11 // pred_region
          _
        $region16: #{tpu_custom_call.1} parent=11 // pred_fallthru
          _
        // Predicated region
        $region17: #{tpu_custom_call.1} parent=11 // pred_check
          %p143 = pneg %p97
        $region18: #{tpu_custom_call.1} parent=11 // pred_check_branch
          %145 = sbr.rel (%p143) target = $region20
        $region19: #{tpu_custom_call.1} parent=11 // pred_region
          _
        $region20: #{tpu_custom_call.1} parent=11 // pred_fallthru
          _
      $region12: #{tpu_custom_call.1} parent=5 // pred_fallthru
        _
      %p146 = scmp.lt.s32.totalorder %s15, 4
      // Predicated region
      $region21: #{tpu_custom_call.1} parent=5 // pred_check
        %p147 = pneg %p146
      $region22: #{tpu_custom_call.1} parent=5 // pred_check_branch
        %149 = sbr.rel (%p147) target = $region24
      $region23: #{tpu_custom_call.1} parent=5 // pred_region
        // Predicated region
        $region25: #{tpu_custom_call.1} parent=23 // pred_check
          %p150 = pneg %p49
        $region26: #{tpu_custom_call.1} parent=23 // pred_check_branch
          %152 = sbr.rel (%p150) target = $region28
        $region27: #{tpu_custom_call.1} parent=23 // pred_region
          %s153 = sand.u32 %s39, 1
          %s154 = scalar_lea.sflag [#allocation3], %s153
          %s155 = sand.u32 %s39, 1
          %s156 = smul.addr %s155, 16
          %s157 = scalar_lea.vmem [#allocation2], %s156
          %s158 = smul.u32 2, %s23
          %s160 = ssub.s32 256, 256
          %161 = vsyncadd %s154, %s160
          %s162 = smul.addr %s22, 4
          %s163 = sadd.s32 %s158, %s162
          %s164 = smul.addr %s163, 128
          %s165 = scalar_lea.hbm %s0, %s164
          %s167 = sshll.u32 %s157, 4
          %s168 = int_to_ptr.vmem [resolvable:$true] %s167
          %170 = dma.hbm_to_vmem [thread:$0]  %s165, 256, %s168, %s154
        $region28: #{tpu_custom_call.1} parent=23 // pred_fallthru
          _
      $region24: #{tpu_custom_call.1} parent=5 // pred_fallthru
        _
      %p171 = scmp.le.s32.totalorder 1, %s15
      %p172 = scmp.lt.s32.totalorder %s15, 5
      %p173 = pnand %p171, %p172
      %p174 = pneg %p173
      // Predicated region
      $region29: #{tpu_custom_call.1} parent=5 // pred_check
        _
      $region30: #{tpu_custom_call.1} parent=5 // pred_check_branch
        %176 = sbr.rel (%p173) target = $region32
      $region31: #{tpu_custom_call.1} parent=5 // pred_region
        %s177 = ssub.s32 %s15, 1
        %s178 = sand.u32 %s42, 1
        %s179 = scalar_lea.sflag [#allocation3], %s178
        %s180 = sand.u32 %s42, 1
        %s181 = smul.addr %s180, 16
        %s182 = scalar_lea.vmem [#allocation2], %s181
        // Predicated region
        $region33: #{tpu_custom_call.1} parent=31 // pred_check
          %p183 = pneg %p55
        $region34: #{tpu_custom_call.1} parent=31 // pred_check_branch
          %185 = sbr.rel (%p183) target = $region36
        $region35: #{tpu_custom_call.1} parent=31 // pred_region
          %186 = dma.done %s179, 256
        $region36: #{tpu_custom_call.1} parent=31 // pred_fallthru
          _
        %s187 = sand.u32 %s42, 1
        %s188 = scalar_lea.sflag [#allocation3], %s187
        %s189 = sand.u32 %s42, 1
        %s190 = smul.addr %s189, 16
        %s191 = scalar_lea.vmem [#allocation2], %s190
        %p192 = pneg %p55
        %p193 = pneg %p52
        %p194 = pneg %p76
        %p195 = pneg %p73
        %p196 = pneg %p97
        %p197 = pneg %p94
        %p198 = pneg %p125
        %p199 = pneg %p122
        %s200 = sand.u32 %s112, 1
        %s201 = scalar_lea.sflag [#allocation4], %s200
        %s202 = sand.u32 %s112, 1
        %s203 = smul.addr %s202, 16
        %s204 = scalar_lea.vmem [#allocation5], %s203
        %s205 = smul.u32 2, %s25
        %s206 = smul.u32 2, %s25
        %v207 = vld [vmem:[%s182] sm:$0xff]
        %v208 = vld [vmem:[%s182 + $0x8] sm:$0xff]
        %v209 = vld [vmem:[%s1] sm:$0xff]
        %v210 = vld [vmem:[%s2] sm:$0xff]
        %212 = vset.pattern.permute.xlu0 0
        %213 = vperm.xlu0 %212, %v210
        %v214 = vpop.permute.xlu0 %213
        %vm216 = vcmask 64512
        %v218 = vsel %vm216, %v209, 0
        %220 = vmatprep.subr.mxu0 %v208
        %221 = vmatpush1.msra.mxu0 %v207
        %222 = vmatprep.subr.mxu0 0.0
        %223 = vmatpush1.msra.mxu0 0.0
        %224 = vmatprep.subr.mxu0 0.0
        %225 = vmatpush1.msra.mxu0 0.0
        %226 = vmatprep.subr.mxu0 0.0
        %227 = vmatpush1.msra.mxu0 0.0
        %228 = vmatprep.subr.mxu0 0.0
        %229 = vmatpush1.msra.mxu0 0.0
        %230 = vmatprep.subr.mxu0 0.0
        %231 = vmatpush1.msra.mxu0 0.0
        %232 = vmatprep.subr.mxu0 0.0
        %233 = vmatpush1.msra.mxu0 0.0
        %234 = vmatprep.subr.mxu0 0.0
        %235 = vmatpush1.msra.mxu0 0.0
        %236 = vmatprep.subr.mxu0 0.0
        %237 = vmatpush1.msra.mxu0 0.0
        %238 = vmatprep.subr.mxu0 0.0
        %239 = vmatpush1.msra.mxu0 0.0
        %240 = vmatprep.subr.mxu0 0.0
        %241 = vmatpush1.msra.mxu0 0.0
        %242 = vmatprep.subr.mxu0 0.0
        %243 = vmatpush1.msra.mxu0 0.0
        %244 = vmatprep.subr.mxu0 0.0
        %245 = vmatpush1.msra.mxu0 0.0
        %246 = vmatprep.subr.mxu0 0.0
        %247 = vmatpush1.msra.mxu0 0.0
        %248 = vmatprep.subr.mxu0 0.0
        %249 = vmatpush1.msra.mxu0 0.0
        %250 = vmatprep.subr.mxu0 0.0
        %251 = vmatpush1.msra.mxu0 0.0
        %252 = vmatprep.subr.mxu0 0.0
        %253 = vmatpush1.msra.mxu0 0.0
        %254 = vmatprep.subr.mxu0 0.0
        %255 = vmatpush1.msra.mxu0 0.0
        %256 = vmatprep.subr.mxu0 0.0
        %257 = vmatpush1.msra.mxu0 0.0
        %258 = vmatprep.subr.mxu0 0.0
        %259 = vmatpush1.msra.mxu0 0.0
        %260 = vmatprep.subr.mxu0 0.0
        %261 = vmatpush1.msra.mxu0 0.0
        %262 = vmatprep.subr.mxu0 0.0
        %263 = vmatpush1.msra.mxu0 0.0
        %264 = vmatprep.subr.mxu0 0.0
        %265 = vmatpush1.msra.mxu0 0.0
        %266 = vmatprep.subr.mxu0 0.0
        %267 = vmatpush1.msra.mxu0 0.0
        %268 = vmatprep.subr.mxu0 0.0
        %269 = vmatpush1.msra.mxu0 0.0
        %270 = vmatprep.subr.mxu0 0.0
        %271 = vmatpush1.msra.mxu0 0.0
        %272 = vmatprep.subr.mxu0 0.0
        %273 = vmatpush1.msra.mxu0 0.0
        %274 = vmatprep.subr.mxu0 0.0
        %275 = vmatpush1.msra.mxu0 0.0
        %276 = vmatprep.subr.mxu0 0.0
        %277 = vmatpush1.msra.mxu0 0.0
        %278 = vmatprep.subr.mxu0 0.0
        %279 = vmatpush1.msra.mxu0 0.0
        %280 = vmatprep.subr.mxu0 0.0
        %281 = vmatpush1.msra.mxu0 0.0
        %282 = vmatprep.subr.mxu0 0.0
        %283 = vmatpush1.msra.mxu0 0.0
        %284 = vmatprep.mubr.f32.mxu0 0.0
        %285 = vmatmul.mubr.f32.gmra.mrb[0].mxu0 %v218
        %v286 = vpop.f32.mrb[0].mxu0
        %v287 = vadd.f32 %v214, %v286
        %v288 = vpop.f32.mrb[0].mxu0
        %v289 = vadd.f32 %v214, %v288
        %290 = vdwg.mxu0
        %v291 = vmul.f32 %v287, 0.5
        %v292 = vmul.f32 %v289, 0.5
        %v293 = vadd.f32 %v291, %v207
        %v294 = vadd.f32 %v292, %v208
        %295 = vst [vmem:[%s204] sm:$0xff] %v293
        %296 = vst [vmem:[%s204 + $0x8] sm:$0xff] %v294
        %s297 = sand.u32 %s112, 1
        %s298 = scalar_lea.sflag [#allocation4], %s297
        %s299 = sand.u32 %s112, 1
        %s300 = smul.addr %s299, 16
        %s301 = scalar_lea.vmem [#allocation5], %s300
        // Predicated region
        $region37: #{tpu_custom_call.1} parent=31 // pred_check
          %p302 = pneg %p122
        $region38: #{tpu_custom_call.1} parent=31 // pred_check_branch
          %304 = sbr.rel (%p302) target = $region40
        $region39: #{tpu_custom_call.1} parent=31 // pred_region
          %s305 = smul.u32 2, %s25
          %s307 = ssub.s32 256, 256
          %308 = vsyncadd %s298, %s307
          %s309 = smul.addr %s24, 4
          %s310 = sadd.s32 %s305, %s309
          %s311 = smul.addr %s310, 128
          %s312 = scalar_lea.hbm %s3, %s311
          %s314 = sshll.u32 %s301, 4
          %s315 = int_to_ptr.vmem [resolvable:$true] %s314
          %317 = dma.vmem_to_hbm [thread:$0]  %s315, 256, %s312, %s298
        $region40: #{tpu_custom_call.1} parent=31 // pred_fallthru
          _
      $region32: #{tpu_custom_call.1} parent=5 // pred_fallthru
        _
      %p318 = scmp.le.s32.totalorder 2, %s15
      // Predicated region
      $region41: #{tpu_custom_call.1} parent=5 // pred_check
        %p319 = pneg %p318
      $region42: #{tpu_custom_call.1} parent=5 // pred_check_branch
        %321 = sbr.rel (%p319) target = $region44
      $region43: #{tpu_custom_call.1} parent=5 // pred_region
        %s322 = ssub.s32 %s15, 2
        // Predicated region
        $region45: #{tpu_custom_call.1} parent=43 // pred_check
          %p323 = pneg %p128
        $region46: #{tpu_custom_call.1} parent=43 // pred_check_branch
          %325 = sbr.rel (%p323) target = $region48
        $region47: #{tpu_custom_call.1} parent=43 // pred_region
          %s326 = sand.u32 %s113, 1
          %s327 = scalar_lea.sflag [#allocation4], %s326
          %s328 = sand.u32 %s113, 1
          %s329 = smul.addr %s328, 16
          %s330 = scalar_lea.vmem [#allocation5], %s329
          %331 = dma.done %s327, 256
        $region48: #{tpu_custom_call.1} parent=43 // pred_fallthru
          _
      $region44: #{tpu_custom_call.1} parent=5 // pred_fallthru
        _
    $region6: #{tpu_custom_call.1} parent=1 // loop_footer
      %s19 = sadd.s32 1, %s15
    $region7: #{tpu_custom_call.1} parent=1 // loop_footer_branch
      %14 = sbr.rel target = $region3
    $region8: #{tpu_custom_call.1} parent=1 // loop_exit
      _
    %332 = vsyncpa [#allocation3], 1
    %s333 = scalar_lea.sflag [#allocation3], 1
    %334 = vsyncpa %s333, 1
    %335 = vsyncpa [#allocation4], 1
    %s336 = scalar_lea.sflag [#allocation4], 1
    %337 = vsyncpa %s336, 1

</llo_original>
